<compile_context>
chip_gen: v6e
topology: v6e:2x2x1
jax: 0.10.0
libtpu: 0.0.40
codegen_flags: <defaults>
</compile_context>

<pallas_src>
import functools

import jax
import jax.numpy as jnp
import numpy as np
from jax.experimental import pallas as pl
from jax.experimental.pallas import tpu as pltpu


def _round_up(n, m):
    return ((n + m - 1) // m) * m


def _periodic_embedding_kernel(x_ref, e_ref, out_ref, *, half_width):
    # x_ref:   (TB, F)       f32 VMEM
    # e_ref:   (F, 2*F*D)    f32 VMEM  (block-diagonal 2*pi*coef, duplicated
    #                                   into the cos and sin column halves)
    # out_ref: (TB, 2*F*D)   f32 VMEM  -> [cos(z_flat) | sin(z_flat)]
    z = jnp.dot(
        x_ref[...],
        e_ref[...],
        preferred_element_type=jnp.float32,
        precision=jax.lax.Precision.HIGHEST,
    )  # (TB, 2*F*D), already in the flat output layout

    # One lane-dense transcendental pass over the full width:
    # sin(z) == cos(z - pi/2) on the right half.
    col = jax.lax.broadcasted_iota(jnp.int32, (1, out_ref.shape[1]), 1)
    phase = jnp.where(col < half_width, 0.0, -np.pi / 2.0).astype(jnp.float32)
    out_ref[...] = jnp.cos(z + phase)


def periodic_embedding(x, coefficients, *, block_b=2048):
    """x: (B, F) float32; coefficients: (F, D) float32 -> (B, 2*F*D) float32."""
    x = x.astype(jnp.float32)
    coefficients = coefficients.astype(jnp.float32)
    B, F = x.shape
    Fc, D = coefficients.shape
    assert F == Fc
    fd = F * D
    out_w = 2 * fd

    # E[f, g*D + d]        = (f == g) * 2*pi*coef[g, d]   (cos half)
    # E[f, fd + g*D + d]   = (f == g) * 2*pi*coef[g, d]   (sin half)
    scaled = coefficients * jnp.float32(2.0 * np.pi)            # (F, D)
    eye = jnp.eye(F, dtype=jnp.float32)                         # (F, F)
    e_half = (eye[:, :, None] * scaled[None, :, :]).reshape(F, fd)
    e_mat = jnp.concatenate([e_half, e_half], axis=1)           # (F, 2*F*D)

    # Pad batch to a sublane multiple (only when needed, e.g. tiny test batches).
    b_pad = _round_up(B, 8)
    x_in = x if b_pad == B else jnp.pad(x, ((0, b_pad - B), (0, 0)))

    # Batch tile: multiple of 8, ~2k rows -> ~1 MiB output tile (x2 buffers),
    # comfortably within VMEM on v5e/v6e/v7x while staying near HBM roofline.
    tb = min(_round_up(block_b, 8), b_pad)
    grid = (pl.cdiv(b_pad, tb),)

    kernel = functools.partial(_periodic_embedding_kernel, half_width=fd)

    out = pl.pallas_call(
        kernel,
        out_shape=jax.ShapeDtypeStruct((b_pad, out_w), jnp.float32),
        grid_spec=pltpu.PrefetchScalarGridSpec(
            num_scalar_prefetch=0,
            grid=grid,
            in_specs=[
                pl.BlockSpec((tb, F), lambda i: (i, 0)),
                pl.BlockSpec((F, out_w), lambda i: (0, 0)),
            ],
            out_specs=pl.BlockSpec((tb, out_w), lambda i: (i, 0)),
        ),
        compiler_params=pltpu.CompilerParams(
            dimension_semantics=("parallel",),
            vmem_limit_bytes=32 * 1024 * 1024,
        ),
    )(x_in, e_mat)

    if b_pad != B:
        out = out[:B]
    return out


def periodic_embedding_ref(x, coefficients):
    """Pure-JAX reference mirroring the PyTorch forward exactly."""
    z = x[..., None] * coefficients[None] * 2.0 * jnp.pi
    z = z.reshape(x.shape[0], -1)
    return jnp.concatenate([jnp.cos(z), jnp.sin(z)], axis=-1)


if __name__ == "__main__":
    # Config (mirrors embedding_config): num_features=4, num_dimensions=16,
    # variance=0.1, initialisation='normal'.
    batch = 2
    num_features = 4
    num_dimensions = 16
    variance = 0.1

    key = jax.random.PRNGKey(0)
    kx, kc = jax.random.split(key)

    x = jax.random.normal(kx, (batch, num_features), dtype=jnp.float32)
    # torch.normal(0.0, variance, (F, D)) uses `variance` as the std.
    coefficients = variance * jax.random.normal(
        kc, (num_features, num_dimensions), dtype=jnp.float32
    )

    out = periodic_embedding(x, coefficients)
    out = jax.block_until_ready(out)

    ref = periodic_embedding_ref(x, coefficients)
    np.testing.assert_allclose(
        np.asarray(out), np.asarray(ref), rtol=1e-5, atol=1e-5
    )
    assert out.shape == (batch, 2 * num_features * num_dimensions)

    print("KERNEL_OK")
</pallas_src>

<mosaic_0001>
module attributes {stable_mosaic.version = 11 : i64} {
  func.func @_periodic_embedding_kernel(%arg0: i32, %arg1: memref<8x4xf32, #tpu.memory_space<vmem>>, %arg2: memref<4x128xf32, #tpu.memory_space<vmem>>, %arg3: memref<8x128xf32, #tpu.memory_space<vmem>>) attributes {dimension_semantics = [#tpu.dimension_semantics<parallel>], iteration_bounds = array<i64: 1>, scalar_prefetch = 0 : i64, scratch_operands = 0 : i64, tpu.core_type = #tpu.core_type<tc>, window_params = [{transform_indices = @transform_0, window_bounds = array<i64: 8, 4>}, {pipeline_mode = #tpu.pipeline_mode<synchronous>, transform_indices = @transform_1, window_bounds = array<i64: 4, 128>}, {transform_indices = @transform_2, window_bounds = array<i64: 8, 128>}]} {
    %c0 = arith.constant 0 : index
    %c0_0 = arith.constant 0 : index
    %0 = vector.load %arg1[%c0, %c0_0] : memref<8x4xf32, #tpu.memory_space<vmem>>, vector<8x4xf32>
    %c0_1 = arith.constant 0 : index
    %c0_2 = arith.constant 0 : index
    %1 = vector.load %arg2[%c0_1, %c0_2] : memref<4x128xf32, #tpu.memory_space<vmem>>, vector<4x128xf32>
    %cst = arith.constant dense<0.000000e+00> : vector<8x128xf32>
    %2 = tpu.matmul %0, %1, %cst {dimension_numbers = #tpu.dot_dimension_numbers<[1], [0], [0], [1], [0, 0, 1, 1], [], []>, precision = #tpu.contract_precision<fp32>} : vector<8x4xf32>, vector<4x128xf32>, vector<8x128xf32> -> vector<8x128xf32>
    %3 = tpu.iota {dimensions = array<i32: 1>} : vector<1x128xi32>
    %c64_i32 = arith.constant 64 : i32
    %4 = vector.broadcast %c64_i32 : i32 to vector<1x128xi32>
    %5 = arith.cmpi slt, %3, %4 : vector<1x128xi32>
    %cst_3 = arith.constant 0.000000e+00 : f32
    %cst_4 = arith.constant -1.57079637 : f32
    %6 = vector.broadcast %cst_3 : f32 to vector<1x128xf32>
    %7 = vector.broadcast %cst_4 : f32 to vector<1x128xf32>
    %8 = arith.select %5, %6, %7 : vector<1x128xi1>, vector<1x128xf32>
    %9 = vector.broadcast %8 : vector<1x128xf32> to vector<8x128xf32>
    %10 = arith.addf %2, %9 : vector<8x128xf32>
    %11 = math.cos %10 : vector<8x128xf32>
    %c0_5 = arith.constant 0 : index
    %c0_6 = arith.constant 0 : index
    %12 = vector.load %arg3[%c0_5, %c0_6] : memref<8x128xf32, #tpu.memory_space<vmem>>, vector<8x128xf32>
    tpu.vector_store %arg3[%c0_5, %c0_6], %11 {strides = array<i32>} : memref<8x128xf32, #tpu.memory_space<vmem>>, vector<8x128xf32>,
    return
  }
  func.func @transform_0(%arg0: i32) -> (i32, i32) {
    %c0_i32 = arith.constant 0 : i32
    %c0_i32_0 = arith.constant 0 : i32
    return %arg0, %c0_i32 : i32, i32
  }
  func.func @transform_1(%arg0: i32) -> (i32, i32) {
    %c0_i32 = arith.constant 0 : i32
    %c0_i32_0 = arith.constant 0 : i32
    %c0_i32_1 = arith.constant 0 : i32
    return %c0_i32, %c0_i32_0 : i32, i32
  }
  func.func @transform_2(%arg0: i32) -> (i32, i32) {
    %c0_i32 = arith.constant 0 : i32
    %c0_i32_0 = arith.constant 0 : i32
    return %arg0, %c0_i32 : i32, i32
  }
}

</mosaic_0001>

<llo_original>
// kernel: tpu_custom_call.1
$region0: #{tpu_custom_call.1}
  #allocation0 [shape = 'u32[]', space=smem, size = 0x4, offset = 0x4, fixed_abs, tag = 'smem constant byte address 0x4 - core index']
  #allocation1 [shape = 'u32[144,128]{1,0:T(1,128)}', space=vmem, size = 0x12000, scoped, tag = 'internal scratch']
  %s0 = inlined_call_operand.vmem [shape: f32[8,4], index: 0, kind: input, shape index: {}]
  %s1 = inlined_call_operand.vmem [shape: f32[4,128], index: 1, kind: input, shape index: {}]
  %s2 = inlined_call_operand.hbm [shape: f32[8,128], index: 2, kind: output, shape index: {}]
  %s3 = sld [smem:[#allocation0]]
  $region18: #{tpu_custom_call.1} parent=0
    _
  %s5 = ssub.s32 1, %s3
  %s6 = scalar_select 0, %s5, %s3
  $region1: #{tpu_custom_call.1} parent=0
    #allocation2 [shape = 'u8[4096]{0}', space=vmem, size = 0x1000, scoped, tag = 'output window, operand 0, single buffered']
    #allocation3 [shape = 's32[1]{0}', space=sflag, size = 0x4, scoped, tag = 'scoped memory for tpu_custom_call.1']
    %7 = vsyncpa [#allocation3], 0
    // Predicated region
    $region2: #{tpu_custom_call.1} parent=1 // pred_check
      _
    $region3: #{tpu_custom_call.1} parent=1 // pred_check_branch
      %9 = sbr.rel (0) target = $region5
    $region4: #{tpu_custom_call.1} parent=1 // pred_region
      _
    $region5: #{tpu_custom_call.1} parent=1 // pred_fallthru
      _
    // Predicated region
    $region6: #{tpu_custom_call.1} parent=1 // pred_check
      _
    $region7: #{tpu_custom_call.1} parent=1 // pred_check_branch
      %11 = sbr.rel (0) target = $region9
    $region8: #{tpu_custom_call.1} parent=1 // pred_region
      _
    $region9: #{tpu_custom_call.1} parent=1 // pred_fallthru
      _
    %v12 = vld [vmem:[%s0] sm:$0xff]
    %v13 = vld [vmem:[%s1] sm:$0xf]
    %v14 = vlaneseq
    %v15 = vand.u32 %v14, 127
    %vm16 = vcmp.lt.s32.totalorder %v15, 64
    %v17 = vsel %vm16, 0.0, -1.5707964
    %vm18 = vcmask 31744
    %v20 = vsel %vm18, %v12, 0
    %vm22 = vcmask 1043456
    %v24 = vsel %vm22, %v13, 0
    %26 = vmatprep.subr.mxu0 0.0
    %27 = vmatpush1.msra.mxu0 0.0
    %28 = vmatprep.subr.mxu0 0.0
    %29 = vmatpush1.msra.mxu0 0.0
    %30 = vmatprep.subr.mxu0 0.0
    %31 = vmatpush1.msra.mxu0 0.0
    %32 = vmatprep.subr.mxu0 0.0
    %33 = vmatpush1.msra.mxu0 0.0
    %34 = vmatprep.subr.mxu0 0.0
    %35 = vmatpush1.msra.mxu0 0.0
    %36 = vmatprep.subr.mxu0 0.0
    %37 = vmatpush1.msra.mxu0 0.0
    %38 = vmatprep.subr.mxu0 0.0
    %39 = vmatpush1.msra.mxu0 0.0
    %40 = vmatprep.subr.mxu0 0.0
    %41 = vmatpush1.msra.mxu0 0.0
    %42 = vmatprep.subr.mxu0 0.0
    %43 = vmatpush1.msra.mxu0 0.0
    %44 = vmatprep.subr.mxu0 0.0
    %45 = vmatpush1.msra.mxu0 0.0
    %46 = vmatprep.subr.mxu0 0.0
    %47 = vmatpush1.msra.mxu0 0.0
    %48 = vmatprep.subr.mxu0 0.0
    %49 = vmatpush1.msra.mxu0 0.0
    %50 = vmatprep.subr.mxu0 0.0
    %51 = vmatpush1.msra.mxu0 0.0
    %52 = vmatprep.subr.mxu0 0.0
    %53 = vmatpush1.msra.mxu0 0.0
    %54 = vmatprep.subr.mxu0 0.0
    %55 = vmatpush1.msra.mxu0 0.0
    %56 = vmatprep.subr.mxu0 0.0
    %v57 = vand.u32 %v24, 4294901760
    %58 = vmatpush1.msra.mxu0 %v57
    %59 = vmatprep.subr.mxu0 0.0
    %60 = vmatpush2.msra.mxu0 0.0
    %61 = vmatprep.subr.mxu0 0.0
    %62 = vmatpush2.msra.mxu0 0.0
    %63 = vmatprep.subr.mxu0 0.0
    %64 = vmatpush2.msra.mxu0 0.0
    %65 = vmatprep.subr.mxu0 0.0
    %66 = vmatpush2.msra.mxu0 0.0
    %67 = vmatprep.subr.mxu0 0.0
    %68 = vmatpush2.msra.mxu0 0.0
    %69 = vmatprep.subr.mxu0 0.0
    %70 = vmatpush2.msra.mxu0 0.0
    %71 = vmatprep.subr.mxu0 0.0
    %72 = vmatpush2.msra.mxu0 0.0
    %73 = vmatprep.subr.mxu0 0.0
    %74 = vmatpush2.msra.mxu0 0.0
    %75 = vmatprep.subr.mxu0 0.0
    %76 = vmatpush2.msra.mxu0 0.0
    %77 = vmatprep.subr.mxu0 0.0
    %78 = vmatpush2.msra.mxu0 0.0
    %79 = vmatprep.subr.mxu0 0.0
    %80 = vmatpush2.msra.mxu0 0.0
    %81 = vmatprep.subr.mxu0 0.0
    %82 = vmatpush2.msra.mxu0 0.0
    %83 = vmatprep.subr.mxu0 0.0
    %84 = vmatpush2.msra.mxu0 0.0
    %85 = vmatprep.subr.mxu0 0.0
    %86 = vmatpush2.msra.mxu0 0.0
    %87 = vmatprep.subr.mxu0 0.0
    %88 = vmatpush2.msra.mxu0 0.0
    %89 = vmatprep.subr.mxu0 0.0
    %90 = vmatpush2.msra.mxu0 0.0
    %91 = vmatprep.mubr.f32.mxu0 0.0
    %v92 = vand.u32 %v20, 4294901760
    %v93 = vsub.f32 %v20, %v92
    %v94 = vand.u32 %v93, 4294901760
    %v95 = vsub.f32 %v93, %v94
    %v96 = vand.u32 %v95, 4294901760
    %97 = vmatmul.mubr.f32.gmra.mxu0 %v96
    %v98 = vpop.f32.mrf.mxu0
    %v99 = vadd.f32 %v17, %v98
    %v100 = vpop.f32.mrf.mxu0
    %101 = vdwg.mxu0
    %102 = vmatprep.subr.mxu0 0.0
    %103 = vmatpush1.msra.mxu0 0.0
    %104 = vmatprep.subr.mxu0 0.0
    %105 = vmatpush1.msra.mxu0 0.0
    %106 = vmatprep.subr.mxu0 0.0
    %107 = vmatpush1.msra.mxu0 0.0
    %108 = vmatprep.subr.mxu0 0.0
    %109 = vmatpush1.msra.mxu0 0.0
    %110 = vmatprep.subr.mxu0 0.0
    %111 = vmatpush1.msra.mxu0 0.0
    %112 = vmatprep.subr.mxu0 0.0
    %113 = vmatpush1.msra.mxu0 0.0
    %114 = vmatprep.subr.mxu0 0.0
    %115 = vmatpush1.msra.mxu0 0.0
    %116 = vmatprep.subr.mxu0 0.0
    %117 = vmatpush1.msra.mxu0 0.0
    %118 = vmatprep.subr.mxu0 0.0
    %119 = vmatpush1.msra.mxu0 0.0
    %120 = vmatprep.subr.mxu0 0.0
    %121 = vmatpush1.msra.mxu0 0.0
    %122 = vmatprep.subr.mxu0 0.0
    %123 = vmatpush1.msra.mxu0 0.0
    %124 = vmatprep.subr.mxu0 0.0
    %125 = vmatpush1.msra.mxu0 0.0
    %126 = vmatprep.subr.mxu0 0.0
    %127 = vmatpush1.msra.mxu0 0.0
    %128 = vmatprep.subr.mxu0 0.0
    %129 = vmatpush1.msra.mxu0 0.0
    %130 = vmatprep.subr.mxu0 0.0
    %131 = vmatpush1.msra.mxu0 0.0
    %132 = vmatprep.subr.mxu0 0.0
    %v133 = vand.u32 %v24, 4294901760
    %v134 = vsub.f32 %v24, %v133
    %v135 = vand.u32 %v134, 4294901760
    %v136 = vsub.f32 %v134, %v135
    %v137 = vand.u32 %v136, 4294901760
    %138 = vmatpush1.msra.mxu0 %v137
    %139 = vmatprep.subr.mxu0 0.0
    %140 = vmatpush2.msra.mxu0 0.0
    %141 = vmatprep.subr.mxu0 0.0
    %142 = vmatpush2.msra.mxu0 0.0
    %143 = vmatprep.subr.mxu0 0.0
    %144 = vmatpush2.msra.mxu0 0.0
    %145 = vmatprep.subr.mxu0 0.0
    %146 = vmatpush2.msra.mxu0 0.0
    %147 = vmatprep.subr.mxu0 0.0
    %148 = vmatpush2.msra.mxu0 0.0
    %149 = vmatprep.subr.mxu0 0.0
    %150 = vmatpush2.msra.mxu0 0.0
    %151 = vmatprep.subr.mxu0 0.0
    %152 = vmatpush2.msra.mxu0 0.0
    %153 = vmatprep.subr.mxu0 0.0
    %154 = vmatpush2.msra.mxu0 0.0
    %155 = vmatprep.subr.mxu0 0.0
    %156 = vmatpush2.msra.mxu0 0.0
    %157 = vmatprep.subr.mxu0 0.0
    %158 = vmatpush2.msra.mxu0 0.0
    %159 = vmatprep.subr.mxu0 0.0
    %160 = vmatpush2.msra.mxu0 0.0
    %161 = vmatprep.subr.mxu0 0.0
    %162 = vmatpush2.msra.mxu0 0.0
    %163 = vmatprep.subr.mxu0 0.0
    %164 = vmatpush2.msra.mxu0 0.0
    %165 = vmatprep.subr.mxu0 0.0
    %166 = vmatpush2.msra.mxu0 0.0
    %167 = vmatprep.subr.mxu0 0.0
    %168 = vmatpush2.msra.mxu0 0.0
    %169 = vmatprep.subr.mxu0 0.0
    %170 = vmatpush2.msra.mxu0 0.0
    %171 = vmatprep.mubr.f32.mxu0 0.0
    %v172 = vand.u32 %v20, 4294901760
    %173 = vmatmul.mubr.f32.gmra.mxu0 %v172
    %v174 = vpop.f32.mrf.mxu0
    %v175 = vadd.f32 %v99, %v174
    %v176 = vpop.f32.mrf.mxu0
    %177 = vdwg.mxu0
    %178 = vmatprep.subr.mxu0 0.0
    %179 = vmatpush1.msra.mxu0 0.0
    %180 = vmatprep.subr.mxu0 0.0
    %181 = vmatpush1.msra.mxu0 0.0
    %182 = vmatprep.subr.mxu0 0.0
    %183 = vmatpush1.msra.mxu0 0.0
    %184 = vmatprep.subr.mxu0 0.0
    %185 = vmatpush1.msra.mxu0 0.0
    %186 = vmatprep.subr.mxu0 0.0
    %187 = vmatpush1.msra.mxu0 0.0
    %188 = vmatprep.subr.mxu0 0.0
    %189 = vmatpush1.msra.mxu0 0.0
    %190 = vmatprep.subr.mxu0 0.0
    %191 = vmatpush1.msra.mxu0 0.0
    %192 = vmatprep.subr.mxu0 0.0
    %193 = vmatpush1.msra.mxu0 0.0
    %194 = vmatprep.subr.mxu0 0.0
    %195 = vmatpush1.msra.mxu0 0.0
    %196 = vmatprep.subr.mxu0 0.0
    %197 = vmatpush1.msra.mxu0 0.0
    %198 = vmatprep.subr.mxu0 0.0
    %199 = vmatpush1.msra.mxu0 0.0
    %200 = vmatprep.subr.mxu0 0.0
    %201 = vmatpush1.msra.mxu0 0.0
    %202 = vmatprep.subr.mxu0 0.0
    %203 = vmatpush1.msra.mxu0 0.0
    %204 = vmatprep.subr.mxu0 0.0
    %205 = vmatpush1.msra.mxu0 0.0
    %206 = vmatprep.subr.mxu0 0.0
    %207 = vmatpush1.msra.mxu0 0.0
    %208 = vmatprep.subr.mxu0 0.0
    %v209 = vand.u32 %v24, 4294901760
    %v210 = vsub.f32 %v24, %v209
    %211 = vmatpush1.msra.mxu0 %v210
    %212 = vmatprep.subr.mxu0 0.0
    %213 = vmatpush2.msra.mxu0 0.0
    %214 = vmatprep.subr.mxu0 0.0
    %215 = vmatpush2.msra.mxu0 0.0
    %216 = vmatprep.subr.mxu0 0.0
    %217 = vmatpush2.msra.mxu0 0.0
    %218 = vmatprep.subr.mxu0 0.0
    %219 = vmatpush2.msra.mxu0 0.0
    %220 = vmatprep.subr.mxu0 0.0
    %221 = vmatpush2.msra.mxu0 0.0
    %222 = vmatprep.subr.mxu0 0.0
    %223 = vmatpush2.msra.mxu0 0.0
    %224 = vmatprep.subr.mxu0 0.0
    %225 = vmatpush2.msra.mxu0 0.0
    %226 = vmatprep.subr.mxu0 0.0
    %227 = vmatpush2.msra.mxu0 0.0
    %228 = vmatprep.subr.mxu0 0.0
    %229 = vmatpush2.msra.mxu0 0.0
    %230 = vmatprep.subr.mxu0 0.0
    %231 = vmatpush2.msra.mxu0 0.0
    %232 = vmatprep.subr.mxu0 0.0
    %233 = vmatpush2.msra.mxu0 0.0
    %234 = vmatprep.subr.mxu0 0.0
    %235 = vmatpush2.msra.mxu0 0.0
    %236 = vmatprep.subr.mxu0 0.0
    %237 = vmatpush2.msra.mxu0 0.0
    %238 = vmatprep.subr.mxu0 0.0
    %239 = vmatpush2.msra.mxu0 0.0
    %240 = vmatprep.subr.mxu0 0.0
    %241 = vmatpush2.msra.mxu0 0.0
    %242 = vmatprep.subr.mxu0 0.0
    %243 = vmatpush2.msra.mxu0 0.0
    %244 = vmatprep.mubr.f32.mxu0 0.0
    %v245 = vand.u32 %v20, 4294901760
    %v246 = vsub.f32 %v20, %v245
    %247 = vmatmul.mubr.f32.gmra.mxu0 %v246
    %v248 = vpop.f32.mrf.mxu0
    %v249 = vadd.f32 %v175, %v248
    %v250 = vpop.f32.mrf.mxu0
    %251 = vdwg.mxu0
    %252 = vmatprep.subr.mxu0 0.0
    %253 = vmatpush1.msra.mxu0 0.0
    %254 = vmatprep.subr.mxu0 0.0
    %255 = vmatpush1.msra.mxu0 0.0
    %256 = vmatprep.subr.mxu0 0.0
    %257 = vmatpush1.msra.mxu0 0.0
    %258 = vmatprep.subr.mxu0 0.0
    %259 = vmatpush1.msra.mxu0 0.0
    %260 = vmatprep.subr.mxu0 0.0
    %261 = vmatpush1.msra.mxu0 0.0
    %262 = vmatprep.subr.mxu0 0.0
    %263 = vmatpush1.msra.mxu0 0.0
    %264 = vmatprep.subr.mxu0 0.0
    %265 = vmatpush1.msra.mxu0 0.0
    %266 = vmatprep.subr.mxu0 0.0
    %267 = vmatpush1.msra.mxu0 0.0
    %268 = vmatprep.subr.mxu0 0.0
    %269 = vmatpush1.msra.mxu0 0.0
    %270 = vmatprep.subr.mxu0 0.0
    %271 = vmatpush1.msra.mxu0 0.0
    %272 = vmatprep.subr.mxu0 0.0
    %273 = vmatpush1.msra.mxu0 0.0
    %274 = vmatprep.subr.mxu0 0.0
    %275 = vmatpush1.msra.mxu0 0.0
    %276 = vmatprep.subr.mxu0 0.0
    %277 = vmatpush1.msra.mxu0 0.0
    %278 = vmatprep.subr.mxu0 0.0
    %279 = vmatpush1.msra.mxu0 0.0
    %280 = vmatprep.subr.mxu0 0.0
    %281 = vmatpush1.msra.mxu0 0.0
    %282 = vmatprep.subr.mxu0 0.0
    %v283 = vand.u32 %v24, 4294901760
    %284 = vmatpush1.msra.mxu0 %v283
    %285 = vmatprep.subr.mxu0 0.0
    %286 = vmatpush2.msra.mxu0 0.0
    %287 = vmatprep.subr.mxu0 0.0
    %288 = vmatpush2.msra.mxu0 0.0
    %289 = vmatprep.subr.mxu0 0.0
    %290 = vmatpush2.msra.mxu0 0.0
    %291 = vmatprep.subr.mxu0 0.0
    %292 = vmatpush2.msra.mxu0 0.0
    %293 = vmatprep.subr.mxu0 0.0
    %294 = vmatpush2.msra.mxu0 0.0
    %295 = vmatprep.subr.mxu0 0.0
    %296 = vmatpush2.msra.mxu0 0.0
    %297 = vmatprep.subr.mxu0 0.0
    %298 = vmatpush2.msra.mxu0 0.0
    %299 = vmatprep.subr.mxu0 0.0
    %300 = vmatpush2.msra.mxu0 0.0
    %301 = vmatprep.subr.mxu0 0.0
    %302 = vmatpush2.msra.mxu0 0.0
    %303 = vmatprep.subr.mxu0 0.0
    %304 = vmatpush2.msra.mxu0 0.0
    %305 = vmatprep.subr.mxu0 0.0
    %306 = vmatpush2.msra.mxu0 0.0
    %307 = vmatprep.subr.mxu0 0.0
    %308 = vmatpush2.msra.mxu0 0.0
    %309 = vmatprep.subr.mxu0 0.0
    %310 = vmatpush2.msra.mxu0 0.0
    %311 = vmatprep.subr.mxu0 0.0
    %312 = vmatpush2.msra.mxu0 0.0
    %313 = vmatprep.subr.mxu0 0.0
    %314 = vmatpush2.msra.mxu0 0.0
    %315 = vmatprep.subr.mxu0 0.0
    %316 = vmatpush2.msra.mxu0 0.0
    %317 = vmatprep.mubr.f32.mxu0 0.0
    %v318 = vand.u32 %v20, 4294901760
    %v319 = vsub.f32 %v20, %v318
    %v320 = vand.u32 %v319, 4294901760
    %321 = vmatmul.mubr.f32.gmra.mxu0 %v320
    %v322 = vpop.f32.mrf.mxu0
    %v323 = vadd.f32 %v249, %v322
    %v324 = vpop.f32.mrf.mxu0
    %325 = vdwg.mxu0
    %326 = vmatprep.subr.mxu0 0.0
    %327 = vmatpush1.msra.mxu0 0.0
    %328 = vmatprep.subr.mxu0 0.0
    %329 = vmatpush1.msra.mxu0 0.0
    %330 = vmatprep.subr.mxu0 0.0
    %331 = vmatpush1.msra.mxu0 0.0
    %332 = vmatprep.subr.mxu0 0.0
    %333 = vmatpush1.msra.mxu0 0.0
    %334 = vmatprep.subr.mxu0 0.0
    %335 = vmatpush1.msra.mxu0 0.0
    %336 = vmatprep.subr.mxu0 0.0
    %337 = vmatpush1.msra.mxu0 0.0
    %338 = vmatprep.subr.mxu0 0.0
    %339 = vmatpush1.msra.mxu0 0.0
    %340 = vmatprep.subr.mxu0 0.0
    %341 = vmatpush1.msra.mxu0 0.0
    %342 = vmatprep.subr.mxu0 0.0
    %343 = vmatpush1.msra.mxu0 0.0
    %344 = vmatprep.subr.mxu0 0.0
    %345 = vmatpush1.msra.mxu0 0.0
    %346 = vmatprep.subr.mxu0 0.0
    %347 = vmatpush1.msra.mxu0 0.0
    %348 = vmatprep.subr.mxu0 0.0
    %349 = vmatpush1.msra.mxu0 0.0
    %350 = vmatprep.subr.mxu0 0.0
    %351 = vmatpush1.msra.mxu0 0.0
    %352 = vmatprep.subr.mxu0 0.0
    %353 = vmatpush1.msra.mxu0 0.0
    %354 = vmatprep.subr.mxu0 0.0
    %355 = vmatpush1.msra.mxu0 0.0
    %356 = vmatprep.subr.mxu0 0.0
    %v357 = vand.u32 %v24, 4294901760
    %v358 = vsub.f32 %v24, %v357
    %v359 = vand.u32 %v358, 4294901760
    %360 = vmatpush1.msra.mxu0 %v359
    %361 = vmatprep.subr.mxu0 0.0
    %362 = vmatpush2.msra.mxu0 0.0
    %363 = vmatprep.subr.mxu0 0.0
    %364 = vmatpush2.msra.mxu0 0.0
    %365 = vmatprep.subr.mxu0 0.0
    %366 = vmatpush2.msra.mxu0 0.0
    %367 = vmatprep.subr.mxu0 0.0
    %368 = vmatpush2.msra.mxu0 0.0
    %369 = vmatprep.subr.mxu0 0.0
    %370 = vmatpush2.msra.mxu0 0.0
    %371 = vmatprep.subr.mxu0 0.0
    %372 = vmatpush2.msra.mxu0 0.0
    %373 = vmatprep.subr.mxu0 0.0
    %374 = vmatpush2.msra.mxu0 0.0
    %375 = vmatprep.subr.mxu0 0.0
    %376 = vmatpush2.msra.mxu0 0.0
    %377 = vmatprep.subr.mxu0 0.0
    %378 = vmatpush2.msra.mxu0 0.0
    %379 = vmatprep.subr.mxu0 0.0
    %380 = vmatpush2.msra.mxu0 0.0
    %381 = vmatprep.subr.mxu0 0.0
    %382 = vmatpush2.msra.mxu0 0.0
    %383 = vmatprep.subr.mxu0 0.0
    %384 = vmatpush2.msra.mxu0 0.0
    %385 = vmatprep.subr.mxu0 0.0
    %386 = vmatpush2.msra.mxu0 0.0
    %387 = vmatprep.subr.mxu0 0.0
    %388 = vmatpush2.msra.mxu0 0.0
    %389 = vmatprep.subr.mxu0 0.0
    %390 = vmatpush2.msra.mxu0 0.0
    %391 = vmatprep.subr.mxu0 0.0
    %392 = vmatpush2.msra.mxu0 0.0
    %393 = vmatprep.mubr.f32.mxu0 0.0
    %v394 = vand.u32 %v20, 4294901760
    %395 = vmatmul.mubr.f32.gmra.mxu0 %v394
    %v396 = vpop.f32.mrf.mxu0
    %v397 = vadd.f32 %v323, %v396
    %v398 = vpop.f32.mrf.mxu0
    %399 = vdwg.mxu0
    %400 = vmatprep.subr.mxu0 0.0
    %401 = vmatpush1.msra.mxu0 0.0
    %402 = vmatprep.subr.mxu0 0.0
    %403 = vmatpush1.msra.mxu0 0.0
    %404 = vmatprep.subr.mxu0 0.0
    %405 = vmatpush1.msra.mxu0 0.0
    %406 = vmatprep.subr.mxu0 0.0
    %407 = vmatpush1.msra.mxu0 0.0
    %408 = vmatprep.subr.mxu0 0.0
    %409 = vmatpush1.msra.mxu0 0.0
    %410 = vmatprep.subr.mxu0 0.0
    %411 = vmatpush1.msra.mxu0 0.0
    %412 = vmatprep.subr.mxu0 0.0
    %413 = vmatpush1.msra.mxu0 0.0
    %414 = vmatprep.subr.mxu0 0.0
    %415 = vmatpush1.msra.mxu0 0.0
    %416 = vmatprep.subr.mxu0 0.0
    %417 = vmatpush1.msra.mxu0 0.0
    %418 = vmatprep.subr.mxu0 0.0
    %419 = vmatpush1.msra.mxu0 0.0
    %420 = vmatprep.subr.mxu0 0.0
    %421 = vmatpush1.msra.mxu0 0.0
    %422 = vmatprep.subr.mxu0 0.0
    %423 = vmatpush1.msra.mxu0 0.0
    %424 = vmatprep.subr.mxu0 0.0
    %425 = vmatpush1.msra.mxu0 0.0
    %426 = vmatprep.subr.mxu0 0.0
    %427 = vmatpush1.msra.mxu0 0.0
    %428 = vmatprep.subr.mxu0 0.0
    %429 = vmatpush1.msra.mxu0 0.0
    %430 = vmatprep.subr.mxu0 0.0
    %v431 = vand.u32 %v24, 4294901760
    %432 = vmatpush1.msra.mxu0 %v431
    %433 = vmatprep.subr.mxu0 0.0
    %434 = vmatpush2.msra.mxu0 0.0
    %435 = vmatprep.subr.mxu0 0.0
    %436 = vmatpush2.msra.mxu0 0.0
    %437 = vmatprep.subr.mxu0 0.0
    %438 = vmatpush2.msra.mxu0 0.0
    %439 = vmatprep.subr.mxu0 0.0
    %440 = vmatpush2.msra.mxu0 0.0
    %441 = vmatprep.subr.mxu0 0.0
    %442 = vmatpush2.msra.mxu0 0.0
    %443 = vmatprep.subr.mxu0 0.0
    %444 = vmatpush2.msra.mxu0 0.0
    %445 = vmatprep.subr.mxu0 0.0
    %446 = vmatpush2.msra.mxu0 0.0
    %447 = vmatprep.subr.mxu0 0.0
    %448 = vmatpush2.msra.mxu0 0.0
    %449 = vmatprep.subr.mxu0 0.0
    %450 = vmatpush2.msra.mxu0 0.0
    %451 = vmatprep.subr.mxu0 0.0
    %452 = vmatpush2.msra.mxu0 0.0
    %453 = vmatprep.subr.mxu0 0.0
    %454 = vmatpush2.msra.mxu0 0.0
    %455 = vmatprep.subr.mxu0 0.0
    %456 = vmatpush2.msra.mxu0 0.0
    %457 = vmatprep.subr.mxu0 0.0
    %458 = vmatpush2.msra.mxu0 0.0
    %459 = vmatprep.subr.mxu0 0.0
    %460 = vmatpush2.msra.mxu0 0.0
    %461 = vmatprep.subr.mxu0 0.0
    %462 = vmatpush2.msra.mxu0 0.0
    %463 = vmatprep.subr.mxu0 0.0
    %464 = vmatpush2.msra.mxu0 0.0
    %465 = vmatprep.mubr.f32.mxu0 0.0
    %v466 = vand.u32 %v20, 4294901760
    %467 = vmatmul.mubr.f32.gmra.mxu0 %v466
    %v468 = vpop.f32.mrf.mxu0
    %v469 = vadd.f32 %v397, %v468
    %v470 = vpop.f32.mrf.mxu0
    %471 = vdwg.mxu0
    %v472 = vand.u32 2147483647, %v469
    %vm473 = vcmp.le.f32.partialorder %v472, 0.7853982
    %vm474 = vcmp.lt.s32.totalorder %v469, 0
    %v475 = vand.u32 %v469, 2139095040
    %v476 = vshrl.u32 %v475, 23
    %v477 = vsub.s32 %v476, 127
    %v478 = vand.u32 2147483647, %v469
    %v479 = vand.u32 %v478, 8388607
    %v480 = vor.u32 %v479, 8388608
    %v481 = vsub.s32 0, %v480
    %v482 = vadd.s32 %v477, 1
    %vm483 = vcmp.gt.s32.totalorder %v482, 0
    %v484 = vsel %vm483, %v482, 0
    %v485 = vshrl.u32 %v484, 5
    %v486 = vand.u32 %v484, 31
    %v487 = vsub.s32 32, %v486
    %v488 = vshrl.u32 683565275, %v487
    %v489 = vshll.u32 683565275, %v486
    %v490 = vshrl.u32 2475754826, %v487
    %v491 = vor.u32 %v489, %v490
    %v492 = vshll.u32 2475754826, %v486
    %v493 = vshrl.u32 2131351028, %v487
    %v494 = vor.u32 %v492, %v493
    %v495 = vshll.u32 2131351028, %v486
    %v496 = vshrl.u32 2102212464, %v487
    %v497 = vor.u32 %v495, %v496
    %v498 = vshll.u32 2102212464, %v486
    %v499 = vshrl.u32 920167782, %v487
    %v500 = vor.u32 %v498, %v499
    %v501 = vshll.u32 920167782, %v486
    %v502 = vshrl.u32 1326507024, %v487
    %v503 = vor.u32 %v501, %v502
    %vm504 = vcmp.lt.s32.totalorder %v485, 1
    %vm505 = vcmp.lt.s32.totalorder %v485, 2
    %vm506 = vcmp.lt.s32.totalorder %v485, 3
    %vm507 = vcmp.lt.s32.totalorder %v485, 4
    %v508 = vsel %vm504, %v488, %v491
    %v509 = vsel %vm507, %v497, 2102212464
    %v510 = vsel %vm506, %v494, %v509
    %v511 = vsel %vm505, %v508, %v510
    %v512 = vsel %vm504, %v491, %v494
    %v513 = vsel %vm507, %v500, 920167782
    %v514 = vsel %vm506, %v497, %v513
    %v515 = vsel %vm505, %v512, %v514
    %v516 = vsel %vm504, %v494, %v497
    %v517 = vsel %vm507, %v503, 1326507024
    %v518 = vsel %vm506, %v500, %v517
    %v519 = vsel %vm505, %v516, %v518
    %v520 = vshll.u32 %v480, 8
    %v521 = vmul.u32.u64.compose %v520, %v519
    %v522 = vextract.low.u32 %v521
    %v523 = vextract.high.u32 %v521
    %v524 = vmul.u32.u64.compose %v520, %v515
    %v525 = vextract.low.u32 %v524
    %v526 = vextract.high.u32 %v524
    %v527 = vmul.u32 %v520, %v511
    %v528 = vadd.s32 %v523, %v525
    %vm529 = vc.u32 %v523, %v525
    %v530 = vadd.s32 %v526, 1
    %v531 = vsel %vm529, %v530, %v526
    %v532 = vadd.s32 %v527, %v531
    %v533 = vadd.s32 %v532, 536870912
    %v534 = vshrl.u32 %v533, 30
    %v535 = vshll.u32 %v534, 30
    %v536 = vsub.s32 %v532, %v535
    %vm537 = vcmp.lt.s32.totalorder %v536, 0
    %v538 = vsub.s32 0, %v536
    %v539 = vsel %vm537, %v538, %v536
    %v540 = vclz %v539
    %v541 = vsub.s32 %v540, 2
    %vm542 = vcmp.gt.s32.totalorder 0, %v541
    %v543 = vsel %vm542, 0, %v541
    %v544 = vsub.s32 32, %v543
    %v545 = vshll.u32 %v536, %v543
    %v546 = vshrl.u32 %v528, %v544
    %v547 = vor.u32 %v545, %v546
    %v548 = vsub.s32 4294967266, %v543
    %v549 = vadd.s32 %v548, 127
    %v550 = vshll.u32 %v549, 23
    %v551 = vor.u32 4788187, %v550
    %v552 = vand.u32 2147483647, %v551
    %v554 = vcvt.s32.f32 %v547
    %v555 = vmul.f32 %v554, %v552
    %v556 = vxor.u32 %v555, 2147483648
    %v557 = vsel %vm474, %v556, %v555
    %v558 = vsub.s32 4, %v534
    %v559 = vsel %vm474, %v558, %v534
    %v560 = vsel %vm473, %v469, %v557
    %v561 = vsel %vm473, 0, %v559
    %v562 = vcosq.f32.pop %v560
    %v563 = vsinq.f32.pop %v560
    %vm564 = vweird.f32 %v469
    %v565 = vand.u32 %v561, 3
    %vm566 = vcmp.lt.s32.totalorder %v565, 2
    %vm567 = vcmp.eq.s32.totalorder %v565, 0
    %v568 = vxor.u32 %v563, 2147483648
    %v569 = vsel %vm567, %v562, %v568
    %vm570 = vcmp.eq.s32.totalorder %v565, 2
    %v571 = vxor.u32 %v562, 2147483648
    %v572 = vsel %vm570, %v571, %v563
    %v573 = vsel %vm566, %v569, %v572
    %v574 = vsel %vm564, nan, %v573
    %575 = vst [vmem:[#allocation2] sm:$0xff] %v574
    // Predicated region
    $region10: #{tpu_custom_call.1} parent=1 // pred_check
      _
    $region11: #{tpu_custom_call.1} parent=1 // pred_check_branch
      %577 = sbr.rel (0) target = $region13
    $region12: #{tpu_custom_call.1} parent=1 // pred_region
      %s579 = ssub.s32 128, 128
      %580 = vsyncadd [#allocation3], %s579
      %s582 = sshll.u32 [#allocation2], 4
      %s583 = int_to_ptr.vmem [resolvable:$true] %s582
      %585 = dma.vmem_to_hbm [thread:$0]  %s583, 128, %s2, [#allocation3]
    $region13: #{tpu_custom_call.1} parent=1 // pred_fallthru
      _
    // Predicated region
    $region14: #{tpu_custom_call.1} parent=1 // pred_check
      _
    $region15: #{tpu_custom_call.1} parent=1 // pred_check_branch
      %587 = sbr.rel (0) target = $region17
    $region16: #{tpu_custom_call.1} parent=1 // pred_region
      %588 = dma.done [#allocation3], 128
    $region17: #{tpu_custom_call.1} parent=1 // pred_fallthru
      _
    %589 = vsyncpa [#allocation3], 1

</llo_original>
